<compile_context>
chip_gen: v6e
topology: v6e:2x2x1
jax: 0.10.0
libtpu: 0.0.40
codegen_flags: <defaults>
</compile_context>

<pallas_src>
import jax
import jax.numpy as jnp
from jax import lax
from jax.experimental import pallas as pl
from jax.experimental.pallas import tpu as pltpu

DTYPE = jnp.float32


def _round_up(v, m):
    return ((v + m - 1) // m) * m


# ---------------------------------------------------------------------------
# Kernels: one dot per row tile against the resident composite weight.
# ---------------------------------------------------------------------------
def _adapter_kernel(x_ref, w_ref, o_ref):
    # (tm, K) @ (K, N) -> (tm, N), f32 accumulation on the MXU.
    o_ref[...] = jnp.dot(
        x_ref[...], w_ref[...], preferred_element_type=jnp.float32
    ).astype(o_ref.dtype)


def _adapter_residual_kernel(x_ref, w_ref, res_ref, o_ref):
    y = jnp.dot(x_ref[...], w_ref[...], preferred_element_type=jnp.float32)
    o_ref[...] = (res_ref[...].astype(jnp.float32) + y).astype(o_ref.dtype)


# ---------------------------------------------------------------------------
# Row-tile selection: big tiles for roofline, but >= 4 grid steps for megacore.
# ---------------------------------------------------------------------------
def _pick_tm(M, tm_cap=1024, min_steps=4):
    if M <= 256:
        return M                      # single block == full array: always layout-legal
    tm = max(256, -(-M // min_steps)) # cdiv(M, min_steps)
    tm = min(tm, tm_cap)
    tm = _round_up(tm, 8)             # sublane alignment for the row axis
    return min(tm, M)


# ---------------------------------------------------------------------------
# Wrapper: y = (x @ w_down) @ w_up * scale   (+ optional fused residual add)
# ---------------------------------------------------------------------------
def motion_adapter(x, w_down, w_up, scale=1.0, *, residual=None, tm=None, tm_cap=1024):
    """x: (..., in_features); w_down: (in_features, rank); w_up: (rank, out_features)."""
    K = x.shape[-1]
    K2, rank = w_down.shape
    rank2, N = w_up.shape
    assert K == K2 and rank == rank2

    # Composite low-rank weight, scale absorbed.  Tiny (K*r*N) contraction done once
    # per forward as a traced op — a runtime `scale` costs nothing and never recompiles.
    w_eff = (
        jnp.dot(
            w_down.astype(jnp.float32),
            w_up.astype(jnp.float32),
            preferred_element_type=jnp.float32,
        )
        * jnp.asarray(scale, jnp.float32)
    ).astype(x.dtype)

    lead_shape = x.shape[:-1]
    x2 = x.reshape(-1, K)
    M = x2.shape[0]

    if tm is None:
        tm = _pick_tm(M, tm_cap)
    tm = min(tm, M)
    grid = (pl.cdiv(M, tm),)  # ragged last tile handled by Pallas block clamping

    in_specs = [
        pl.BlockSpec((tm, K), lambda i: (i, 0)),   # streamed activation row tile
        pl.BlockSpec((K, N), lambda i: (0, 0)),    # resident composite weight
    ]
    args = [x2, w_eff]
    kernel = _adapter_kernel
    if residual is not None:
        assert residual.shape == lead_shape + (N,)
        in_specs.append(pl.BlockSpec((tm, N), lambda i: (i, 0)))
        args.append(residual.reshape(-1, N))
        kernel = _adapter_residual_kernel

    out = pl.pallas_call(
        kernel,
        out_shape=jax.ShapeDtypeStruct((M, N), x.dtype),
        grid_spec=pltpu.PrefetchScalarGridSpec(
            num_scalar_prefetch=0,
            grid=grid,
            in_specs=in_specs,
            out_specs=pl.BlockSpec((tm, N), lambda i: (i, 0)),
        ),
        compiler_params=pltpu.CompilerParams(
            dimension_semantics=("parallel",),
        ),
    )(*args)

    return out.reshape(*lead_shape, N)


# ---------------------------------------------------------------------------
# Parameter init matching the PyTorch module
# ---------------------------------------------------------------------------
def init_motion_adapter_params(key, in_features, out_features, rank=4, dtype=DTYPE):
    # nn.init.normal_(down.weight, std=1/rank); nn.init.zeros_(up.weight)
    w_down = (jax.random.normal(key, (in_features, rank), jnp.float32) / rank).astype(dtype)
    w_up = jnp.zeros((rank, out_features), dtype)
    return {"w_down": w_down, "w_up": w_up, "scale": 1.0}


if __name__ == "__main__":
    # AnimateDiff temporal-attention hidden states: (batch*tokens, frames, channels).
    in_features = out_features = 128   # lane-dense channel dim
    rank = 4
    batch_tokens, frames = 256, 8      # 2048 rows -> 4 x 512-row tiles (2 per TC on v7x)

    key = jax.random.PRNGKey(0)
    kx, kd, ku = jax.random.split(key, 3)
    x = jax.random.normal(kx, (batch_tokens, frames, in_features), DTYPE)

    # --- module-faithful init: down ~ N(0, (1/rank)^2), up = 0, scale = 1.0 -----------
    p = init_motion_adapter_params(kd, in_features, out_features, rank)
    y0 = jax.block_until_ready(
        motion_adapter(x, p["w_down"], p["w_up"], scale=p["scale"])
    )
    assert y0.shape == (batch_tokens, frames, out_features)
    assert bool(jnp.all(y0 == 0.0))    # zero-initialized up-projection -> exactly zero

    # --- non-degenerate weights + set_scale(0.75): check against plain-JAX reference ---
    w_down = p["w_down"]
    w_up = (jax.random.normal(ku, (rank, out_features), jnp.float32) * 0.02).astype(DTYPE)
    scale = 0.75
    ref = (
        jnp.einsum("bfk,kr,rn->bfn", x, w_down, w_up, precision=lax.Precision.HIGHEST)
        * scale
    )
    y = jax.block_until_ready(motion_adapter(x, w_down, w_up, scale=scale))
    assert bool(jnp.all(jnp.isfinite(y)))
    assert bool(jnp.allclose(y, ref, rtol=1e-3, atol=1e-3))

    # --- ragged row count (M not a multiple of the tile): no pad / no slice in wrapper -
    xr = x[:173]                       # 173 * 8 = 1384 rows
    yr = jax.block_until_ready(motion_adapter(xr, w_down, w_up, scale=scale))
    assert bool(jnp.allclose(yr, ref[:173], rtol=1e-3, atol=1e-3))

    # --- bf16 end-to-end (halves HBM traffic on this mem-bound path) -------------------
    xb = x.astype(jnp.bfloat16)
    wdb = w_down.astype(jnp.bfloat16)
    wub = w_up.astype(jnp.bfloat16)
    yb = jax.block_until_ready(motion_adapter(xb, wdb, wub, scale=scale))
    refb = (
        jnp.einsum(
            "bfk,kr,rn->bfn",
            xb.astype(jnp.float32), wdb.astype(jnp.float32), wub.astype(jnp.float32),
            precision=lax.Precision.HIGHEST,
        )
        * scale
    )
    assert yb.dtype == jnp.bfloat16
    assert bool(jnp.allclose(yb.astype(jnp.float32), refb, rtol=3e-2, atol=3e-3))

    # --- optional fused residual add (caller-side `hidden + adapter(x)` in AnimateDiff)
    base = jax.random.normal(jax.random.PRNGKey(1), ref.shape, DTYPE)
    yf = jax.block_until_ready(
        motion_adapter(x, w_down, w_up, scale=scale, residual=base)
    )
    assert bool(jnp.allclose(yf, base + ref, rtol=1e-3, atol=1e-3))

    print("KERNEL_OK")
</pallas_src>

<mosaic_0001>
module attributes {stable_mosaic.version = 11 : i64} {
  func.func @_adapter_kernel(%arg0: i32, %arg1: memref<512x128xf32, #tpu.memory_space<vmem>>, %arg2: memref<128x128xf32, #tpu.memory_space<vmem>>, %arg3: memref<512x128xf32, #tpu.memory_space<vmem>>) attributes {dimension_semantics = [#tpu.dimension_semantics<parallel>], iteration_bounds = array<i64: 4>, scalar_prefetch = 0 : i64, scratch_operands = 0 : i64, tpu.core_type = #tpu.core_type<tc>, window_params = [{transform_indices = @transform_0, window_bounds = array<i64: 512, 128>}, {pipeline_mode = #tpu.pipeline_mode<synchronous>, transform_indices = @transform_1, window_bounds = array<i64: 128, 128>}, {transform_indices = @transform_2, window_bounds = array<i64: 512, 128>}]} {
    %c0 = arith.constant 0 : index
    %c0_0 = arith.constant 0 : index
    %0 = vector.load %arg1[%c0, %c0_0] : memref<512x128xf32, #tpu.memory_space<vmem>>, vector<512x128xf32>
    %c0_1 = arith.constant 0 : index
    %c0_2 = arith.constant 0 : index
    %1 = vector.load %arg2[%c0_1, %c0_2] : memref<128x128xf32, #tpu.memory_space<vmem>>, vector<128x128xf32>
    %cst = arith.constant dense<0.000000e+00> : vector<512x128xf32>
    %2 = tpu.matmul %0, %1, %cst {dimension_numbers = #tpu.dot_dimension_numbers<[1], [0], [0], [1], [0, 0, 1, 1], [], []>} : vector<512x128xf32>, vector<128x128xf32>, vector<512x128xf32> -> vector<512x128xf32>
    %c0_3 = arith.constant 0 : index
    %c0_4 = arith.constant 0 : index
    %3 = vector.load %arg3[%c0_3, %c0_4] : memref<512x128xf32, #tpu.memory_space<vmem>>, vector<512x128xf32>
    tpu.vector_store %arg3[%c0_3, %c0_4], %2 {strides = array<i32>} : memref<512x128xf32, #tpu.memory_space<vmem>>, vector<512x128xf32>,
    return
  }
  func.func @transform_0(%arg0: i32) -> (i32, i32) {
    %c0_i32 = arith.constant 0 : i32
    %c0_i32_0 = arith.constant 0 : i32
    return %arg0, %c0_i32 : i32, i32
  }
  func.func @transform_1(%arg0: i32) -> (i32, i32) {
    %c0_i32 = arith.constant 0 : i32
    %c0_i32_0 = arith.constant 0 : i32
    %c0_i32_1 = arith.constant 0 : i32
    return %c0_i32, %c0_i32_0 : i32, i32
  }
  func.func @transform_2(%arg0: i32) -> (i32, i32) {
    %c0_i32 = arith.constant 0 : i32
    %c0_i32_0 = arith.constant 0 : i32
    return %arg0, %c0_i32 : i32, i32
  }
}

</mosaic_0001>

<llo_original>
// kernel: tpu_custom_call.1
$region0: #{tpu_custom_call.1}
  #allocation0 [shape = 'u32[]', space=smem, size = 0x4, offset = 0x4, fixed_abs, tag = 'smem constant byte address 0x4 - core index']
  #allocation1 [shape = 'u32[144,128]{1,0:T(1,128)}', space=vmem, size = 0x12000, scoped, tag = 'internal scratch']
  %s0 = inlined_call_operand.hbm [shape: f32[2048,128], index: 0, kind: input, shape index: {}]
  %s1 = inlined_call_operand.hbm [shape: f32[128,128], index: 1, kind: input, shape index: {}]
  %s2 = inlined_call_operand.hbm [shape: f32[2048,128], index: 2, kind: output, shape index: {}]
  %s3 = sld [smem:[#allocation0]]
  $region49: #{tpu_custom_call.1} parent=0
    _
  %s5 = ssub.s32 1, %s3
  %s6 = scalar_select 0, %s5, %s3
  $region1: #{tpu_custom_call.1} parent=0
    #allocation2 [shape = 'u8[524288]{0}', space=vmem, size = 0x80000, scoped, tag = 'input window, operand 0']
    #allocation3 [shape = 's32[2]{0}', space=sflag, size = 0x8, scoped, tag = 'scoped memory for tpu_custom_call.1']
    #allocation4 [shape = 's32[2]{0}', space=sflag, size = 0x8, scoped, tag = 'scoped memory for tpu_custom_call.1']
    #allocation5 [shape = 'u8[65536]{0}', space=vmem, size = 0x10000, scoped, tag = 'input window, operand 1, single buffered']
    #allocation6 [shape = 's32[1]{0}', space=sflag, size = 0x4, scoped, tag = 'scoped memory for tpu_custom_call.1']
    #allocation7 [shape = 'u8[524288]{0}', space=vmem, size = 0x80000, scoped, tag = 'output window, operand 0']
    %7 = vsyncpa [#allocation3], 0
    %s8 = scalar_lea.sflag [#allocation3], 1
    %9 = vsyncpa %s8, 0
    %10 = vsyncpa [#allocation6], 0
    %11 = vsyncpa [#allocation4], 0
    %s12 = scalar_lea.sflag [#allocation4], 1
    %13 = vsyncpa %s12, 0
    loop: start=0, step=1, limit=6
    $region2: #{tpu_custom_call.1} parent=1 // loop_pre_header
      _
    $region3: #{tpu_custom_call.1} parent=1 // loop_header
      %s15 = sphi 0, %s19
      %p16 = scmp.ge.s32.totalorder %s15, 6
      %s25 = sphi 0, %s27
      %s28 = sphi 0, %s25
      %s29 = sphi 0, %s28
      %s45 = sphi 0, %s29
      %s49 = sphi 0, %s49
      %s51 = sphi 0, %s49
      %s52 = sphi 0, %s51
      %s66 = sphi 0, %s52
      %s72 = sphi 0, %s74
      %s75 = sphi 0, %s72
      %s76 = sphi 0, %s75
      %s92 = sphi 0, %s76
    $region4: #{tpu_custom_call.1} parent=1 // loop_header_branch
      %18 = sbr.rel (%p16) target = $region8
    $region5: #{tpu_custom_call.1} parent=1 // loop_body
      %s20 = ssub.s32 %s15, 1
      %s21 = ssub.s32 %s15, 2
      %s22 = sadd.s32 %s15, 1
      %s23 = ssub.s32 %s15, %s22
      %p24 = scmp.eq.s32.totalorder %s23, 0
      %s26 = sadd.s32 %s25, 1
      %s27 = scalar_select %p24, %s25, %s26
      %p30 = pneg %p24
      %p31 = scmp.eq.s32.totalorder %s15, 3
      %p32 = por %p30, %p31
      %p33 = scmp.ne.s32.totalorder %s25, %s28
      %p34 = scmp.eq.s32.totalorder %s15, 0
      %p35 = por %p33, %p34
      %p36 = scmp.ne.s32.totalorder %s25, %s28
      %p37 = scmp.eq.s32.totalorder %s20, 3
      %p38 = por %p36, %p37
      %p39 = scmp.ne.s32.totalorder %s28, %s29
      %p40 = scmp.eq.s32.totalorder %s20, 0
      %p41 = por %p39, %p40
      %p42 = scmp.ne.s32.totalorder %s28, %s29
      %p43 = scmp.eq.s32.totalorder %s21, 3
      %p44 = por %p42, %p43
      %p46 = scmp.ne.s32.totalorder %s29, %s45
      %p47 = scmp.eq.s32.totalorder %s21, 0
      %p48 = por %p46, %p47
      %s50 = sadd.s32 %s49, 1
      %p53 = scmp.eq.s32.totalorder %s15, 3
      %p54 = scmp.ne.s32.totalorder %s49, %s51
      %p55 = scmp.eq.s32.totalorder %s15, 0
      %p56 = por %p54, %p55
      %p57 = scmp.ne.s32.totalorder %s49, %s51
      %p58 = scmp.eq.s32.totalorder %s20, 3
      %p59 = por %p57, %p58
      %p60 = scmp.ne.s32.totalorder %s51, %s52
      %p61 = scmp.eq.s32.totalorder %s20, 0
      %p62 = por %p60, %p61
      %p63 = scmp.ne.s32.totalorder %s51, %s52
      %p64 = scmp.eq.s32.totalorder %s21, 3
      %p65 = por %p63, %p64
      %p67 = scmp.ne.s32.totalorder %s52, %s66
      %p68 = scmp.eq.s32.totalorder %s21, 0
      %p69 = por %p67, %p68
      %s70 = ssub.s32 %s15, %s22
      %p71 = scmp.eq.s32.totalorder %s70, 0
      %s73 = sadd.s32 %s72, 1
      %s74 = scalar_select %p71, %s72, %s73
      %p77 = pneg %p71
      %p78 = scmp.eq.s32.totalorder %s15, 3
      %p79 = por %p77, %p78
      %p80 = scmp.ne.s32.totalorder %s72, %s75
      %p81 = scmp.eq.s32.totalorder %s15, 0
      %p82 = por %p80, %p81
      %p83 = scmp.ne.s32.totalorder %s72, %s75
      %p84 = scmp.eq.s32.totalorder %s20, 3
      %p85 = por %p83, %p84
      %p86 = scmp.ne.s32.totalorder %s75, %s76
      %p87 = scmp.eq.s32.totalorder %s20, 0
      %p88 = por %p86, %p87
      %p89 = scmp.ne.s32.totalorder %s75, %s76
      %p90 = scmp.eq.s32.totalorder %s21, 3
      %p91 = por %p89, %p90
      %p93 = scmp.ne.s32.totalorder %s76, %s92
      %p94 = scmp.eq.s32.totalorder %s21, 0
      %p95 = por %p93, %p94
      %p96 = scmp.le.s32.totalorder 1, %s15
      %p97 = scmp.lt.s32.totalorder %s15, 5
      %p98 = pnand %p96, %p97
      %p99 = pneg %p98
      // Predicated region
      $region9: #{tpu_custom_call.1} parent=5 // pred_check
        _
      $region10: #{tpu_custom_call.1} parent=5 // pred_check_branch
        %101 = sbr.rel (%p98) target = $region12
      $region11: #{tpu_custom_call.1} parent=5 // pred_region
        %s102 = ssub.s32 %s15, 1
        // Predicated region
        $region13: #{tpu_custom_call.1} parent=11 // pred_check
          %p103 = pneg %p62
        $region14: #{tpu_custom_call.1} parent=11 // pred_check_branch
          %105 = sbr.rel (%p103) target = $region16
        $region15: #{tpu_custom_call.1} parent=11 // pred_region
          %s107 = ssub.s32 2048, 2048
          %108 = vsyncadd [#allocation6], %s107
          %s109 = sshll.u32 [#allocation5], 4
          %s110 = int_to_ptr.vmem [resolvable:$true] %s109
          %115 = dma.hbm_to_vmem [thread:$0]  %s1, 2048, %s110, [#allocation6], 128, 128, 8
        $region16: #{tpu_custom_call.1} parent=11 // pred_fallthru
          _
      $region12: #{tpu_custom_call.1} parent=5 // pred_fallthru
        _
      %p116 = scmp.lt.s32.totalorder %s15, 4
      // Predicated region
      $region17: #{tpu_custom_call.1} parent=5 // pred_check
        %p117 = pneg %p116
      $region18: #{tpu_custom_call.1} parent=5 // pred_check_branch
        %119 = sbr.rel (%p117) target = $region20
      $region19: #{tpu_custom_call.1} parent=5 // pred_region
        // Predicated region
        $region21: #{tpu_custom_call.1} parent=19 // pred_check
          %p120 = pneg %p35
        $region22: #{tpu_custom_call.1} parent=19 // pred_check_branch
          %122 = sbr.rel (%p120) target = $region24
        $region23: #{tpu_custom_call.1} parent=19 // pred_region
          %s123 = sand.u32 %s25, 1
          %s124 = scalar_lea.sflag [#allocation3], %s123
          %s125 = sand.u32 %s25, 1
          %s126 = smul.addr %s125, 512
          %s127 = scalar_lea.vmem [#allocation2], %s126
          %s128 = smul.u32 64, %s15
          %s130 = ssub.s32 8192, 8192
          %131 = vsyncadd %s124, %s130
          %s132 = smul.addr %s128, 128
          %s133 = scalar_lea.hbm %s0, %s132
          %s134 = sshll.u32 %s127, 4
          %s135 = int_to_ptr.vmem [resolvable:$true] %s134
          %140 = dma.hbm_to_vmem [thread:$0]  %s133, 8192, %s135, %s124, 128, 128, 8
        $region24: #{tpu_custom_call.1} parent=19 // pred_fallthru
          _
      $region20: #{tpu_custom_call.1} parent=5 // pred_fallthru
        _
      %p141 = scmp.le.s32.totalorder 1, %s15
      %p142 = scmp.lt.s32.totalorder %s15, 5
      %p143 = pnand %p141, %p142
      %p144 = pneg %p143
      // Predicated region
      $region25: #{tpu_custom_call.1} parent=5 // pred_check
        _
      $region26: #{tpu_custom_call.1} parent=5 // pred_check_branch
        %146 = sbr.rel (%p143) target = $region28
      $region27: #{tpu_custom_call.1} parent=5 // pred_region
        %s147 = ssub.s32 %s15, 1
        %s148 = sand.u32 %s28, 1
        %s149 = scalar_lea.sflag [#allocation3], %s148
        %s150 = sand.u32 %s28, 1
        %s151 = smul.addr %s150, 512
        %s152 = scalar_lea.vmem [#allocation2], %s151
        // Predicated region
        $region29: #{tpu_custom_call.1} parent=27 // pred_check
          %p153 = pneg %p41
        $region30: #{tpu_custom_call.1} parent=27 // pred_check_branch
          %155 = sbr.rel (%p153) target = $region32
        $region31: #{tpu_custom_call.1} parent=27 // pred_region
          %156 = dma.done %s149, 8192
        $region32: #{tpu_custom_call.1} parent=27 // pred_fallthru
          _
        // Predicated region
        $region33: #{tpu_custom_call.1} parent=27 // pred_check
          %p157 = pneg %p62
        $region34: #{tpu_custom_call.1} parent=27 // pred_check_branch
          %159 = sbr.rel (%p157) target = $region36
        $region35: #{tpu_custom_call.1} parent=27 // pred_region
          %160 = dma.done [#allocation6], 2048
        $region36: #{tpu_custom_call.1} parent=27 // pred_fallthru
          _
        %s161 = sand.u32 %s28, 1
        %s162 = scalar_lea.sflag [#allocation3], %s161
        %s163 = sand.u32 %s28, 1
        %s164 = smul.addr %s163, 512
        %s165 = scalar_lea.vmem [#allocation2], %s164
        %p166 = pneg %p41
        %p167 = pneg %p38
        %p168 = pneg %p62
        %p169 = pneg %p59
        %p170 = pneg %p88
        %p171 = pneg %p85
        %s172 = sand.u32 %s75, 1
        %s173 = scalar_lea.sflag [#allocation4], %s172
        %s174 = sand.u32 %s75, 1
        %s175 = smul.addr %s174, 512
        %s176 = scalar_lea.vmem [#allocation7], %s175
        %s177 = smul.u32 64, %s20
        %s178 = smul.u32 64, %s20
        %v179 = vld [vmem:[%s152] sm:$0xff]
        %v180 = vld [vmem:[%s152 + $0x8] sm:$0xff]
        %v181 = vld [vmem:[%s152 + $0x10] sm:$0xff]
        %v182 = vld [vmem:[%s152 + $0x18] sm:$0xff]
        %v183 = vld [vmem:[%s152 + $0x20] sm:$0xff]
        %v184 = vld [vmem:[%s152 + $0x28] sm:$0xff]
        %v185 = vld [vmem:[%s152 + $0x30] sm:$0xff]
        %v186 = vld [vmem:[%s152 + $0x38] sm:$0xff]
        %v187 = vld [vmem:[%s152 + $0x40] sm:$0xff]
        %v188 = vld [vmem:[%s152 + $0x48] sm:$0xff]
        %v189 = vld [vmem:[%s152 + $0x50] sm:$0xff]
        %v190 = vld [vmem:[%s152 + $0x58] sm:$0xff]
        %v191 = vld [vmem:[%s152 + $0x60] sm:$0xff]
        %v192 = vld [vmem:[%s152 + $0x68] sm:$0xff]
        %v193 = vld [vmem:[%s152 + $0x70] sm:$0xff]
        %v194 = vld [vmem:[%s152 + $0x78] sm:$0xff]
        %v195 = vld [vmem:[%s152 + $0x80] sm:$0xff]
        %v196 = vld [vmem:[%s152 + $0x88] sm:$0xff]
        %v197 = vld [vmem:[%s152 + $0x90] sm:$0xff]
        %v198 = vld [vmem:[%s152 + $0x98] sm:$0xff]
        %v199 = vld [vmem:[%s152 + $0xa0] sm:$0xff]
        %v200 = vld [vmem:[%s152 + $0xa8] sm:$0xff]
        %v201 = vld [vmem:[%s152 + $0xb0] sm:$0xff]
        %v202 = vld [vmem:[%s152 + $0xb8] sm:$0xff]
        %v203 = vld [vmem:[%s152 + $0xc0] sm:$0xff]
        %v204 = vld [vmem:[%s152 + $0xc8] sm:$0xff]
        %v205 = vld [vmem:[%s152 + $0xd0] sm:$0xff]
        %v206 = vld [vmem:[%s152 + $0xd8] sm:$0xff]
        %v207 = vld [vmem:[%s152 + $0xe0] sm:$0xff]
        %v208 = vld [vmem:[%s152 + $0xe8] sm:$0xff]
        %v209 = vld [vmem:[%s152 + $0xf0] sm:$0xff]
        %v210 = vld [vmem:[%s152 + $0xf8] sm:$0xff]
        %v211 = vld [vmem:[%s152 + $0x100] sm:$0xff]
        %v212 = vld [vmem:[%s152 + $0x108] sm:$0xff]
        %v213 = vld [vmem:[%s152 + $0x110] sm:$0xff]
        %v214 = vld [vmem:[%s152 + $0x118] sm:$0xff]
        %v215 = vld [vmem:[%s152 + $0x120] sm:$0xff]
        %v216 = vld [vmem:[%s152 + $0x128] sm:$0xff]
        %v217 = vld [vmem:[%s152 + $0x130] sm:$0xff]
        %v218 = vld [vmem:[%s152 + $0x138] sm:$0xff]
        %v219 = vld [vmem:[%s152 + $0x140] sm:$0xff]
        %v220 = vld [vmem:[%s152 + $0x148] sm:$0xff]
        %v221 = vld [vmem:[%s152 + $0x150] sm:$0xff]
        %v222 = vld [vmem:[%s152 + $0x158] sm:$0xff]
        %v223 = vld [vmem:[%s152 + $0x160] sm:$0xff]
        %v224 = vld [vmem:[%s152 + $0x168] sm:$0xff]
        %v225 = vld [vmem:[%s152 + $0x170] sm:$0xff]
        %v226 = vld [vmem:[%s152 + $0x178] sm:$0xff]
        %v227 = vld [vmem:[%s152 + $0x180] sm:$0xff]
        %v228 = vld [vmem:[%s152 + $0x188] sm:$0xff]
        %v229 = vld [vmem:[%s152 + $0x190] sm:$0xff]
        %v230 = vld [vmem:[%s152 + $0x198] sm:$0xff]
        %v231 = vld [vmem:[%s152 + $0x1a0] sm:$0xff]
        %v232 = vld [vmem:[%s152 + $0x1a8] sm:$0xff]
        %v233 = vld [vmem:[%s152 + $0x1b0] sm:$0xff]
        %v234 = vld [vmem:[%s152 + $0x1b8] sm:$0xff]
        %v235 = vld [vmem:[%s152 + $0x1c0] sm:$0xff]
        %v236 = vld [vmem:[%s152 + $0x1c8] sm:$0xff]
        %v237 = vld [vmem:[%s152 + $0x1d0] sm:$0xff]
        %v238 = vld [vmem:[%s152 + $0x1d8] sm:$0xff]
        %v239 = vld [vmem:[%s152 + $0x1e0] sm:$0xff]
        %v240 = vld [vmem:[%s152 + $0x1e8] sm:$0xff]
        %v241 = vld [vmem:[%s152 + $0x1f0] sm:$0xff]
        %v242 = vld [vmem:[%s152 + $0x1f8] sm:$0xff]
        %v243 = vld [vmem:[#allocation5] sm:$0xff]
        %v244 = vld [vmem:[#allocation5 + $0x8] sm:$0xff]
        %v245 = vld [vmem:[#allocation5 + $0x10] sm:$0xff]
        %v246 = vld [vmem:[#allocation5 + $0x18] sm:$0xff]
        %v247 = vld [vmem:[#allocation5 + $0x20] sm:$0xff]
        %v248 = vld [vmem:[#allocation5 + $0x28] sm:$0xff]
        %v249 = vld [vmem:[#allocation5 + $0x30] sm:$0xff]
        %v250 = vld [vmem:[#allocation5 + $0x38] sm:$0xff]
        %v251 = vld [vmem:[#allocation5 + $0x40] sm:$0xff]
        %v252 = vld [vmem:[#allocation5 + $0x48] sm:$0xff]
        %v253 = vld [vmem:[#allocation5 + $0x50] sm:$0xff]
        %v254 = vld [vmem:[#allocation5 + $0x58] sm:$0xff]
        %v255 = vld [vmem:[#allocation5 + $0x60] sm:$0xff]
        %v256 = vld [vmem:[#allocation5 + $0x68] sm:$0xff]
        %v257 = vld [vmem:[#allocation5 + $0x70] sm:$0xff]
        %v258 = vld [vmem:[#allocation5 + $0x78] sm:$0xff]
        %259 = vmatprep.subr.mxu0 0.0
        %260 = vmatpush1.msra.mxu0 %v258
        %261 = vmatprep.subr.mxu0 0.0
        %262 = vmatpush1.msra.mxu0 %v257
        %263 = vmatprep.subr.mxu0 0.0
        %264 = vmatpush1.msra.mxu0 %v256
        %265 = vmatprep.subr.mxu0 0.0
        %266 = vmatpush1.msra.mxu0 %v255
        %267 = vmatprep.subr.mxu0 0.0
        %268 = vmatpush1.msra.mxu0 %v254
        %269 = vmatprep.subr.mxu0 0.0
        %270 = vmatpush1.msra.mxu0 %v253
        %271 = vmatprep.subr.mxu0 0.0
        %272 = vmatpush1.msra.mxu0 %v252
        %273 = vmatprep.subr.mxu0 0.0
        %274 = vmatpush1.msra.mxu0 %v251
        %275 = vmatprep.subr.mxu0 0.0
        %276 = vmatpush1.msra.mxu0 %v250
        %277 = vmatprep.subr.mxu0 0.0
        %278 = vmatpush1.msra.mxu0 %v249
        %279 = vmatprep.subr.mxu0 0.0
        %280 = vmatpush1.msra.mxu0 %v248
        %281 = vmatprep.subr.mxu0 0.0
        %282 = vmatpush1.msra.mxu0 %v247
        %283 = vmatprep.subr.mxu0 0.0
        %284 = vmatpush1.msra.mxu0 %v246
        %285 = vmatprep.subr.mxu0 0.0
        %286 = vmatpush1.msra.mxu0 %v245
        %287 = vmatprep.subr.mxu0 0.0
        %288 = vmatpush1.msra.mxu0 %v244
        %289 = vmatprep.subr.mxu0 0.0
        %290 = vmatpush1.msra.mxu0 %v243
        %291 = vmatprep.subr.mxu0 0.0
        %292 = vmatpush2.msra.mxu0 0.0
        %293 = vmatprep.subr.mxu0 0.0
        %294 = vmatpush2.msra.mxu0 0.0
        %295 = vmatprep.subr.mxu0 0.0
        %296 = vmatpush2.msra.mxu0 0.0
        %297 = vmatprep.subr.mxu0 0.0
        %298 = vmatpush2.msra.mxu0 0.0
        %299 = vmatprep.subr.mxu0 0.0
        %300 = vmatpush2.msra.mxu0 0.0
        %301 = vmatprep.subr.mxu0 0.0
        %302 = vmatpush2.msra.mxu0 0.0
        %303 = vmatprep.subr.mxu0 0.0
        %304 = vmatpush2.msra.mxu0 0.0
        %305 = vmatprep.subr.mxu0 0.0
        %306 = vmatpush2.msra.mxu0 0.0
        %307 = vmatprep.subr.mxu0 0.0
        %308 = vmatpush2.msra.mxu0 0.0
        %309 = vmatprep.subr.mxu0 0.0
        %310 = vmatpush2.msra.mxu0 0.0
        %311 = vmatprep.subr.mxu0 0.0
        %312 = vmatpush2.msra.mxu0 0.0
        %313 = vmatprep.subr.mxu0 0.0
        %314 = vmatpush2.msra.mxu0 0.0
        %315 = vmatprep.subr.mxu0 0.0
        %316 = vmatpush2.msra.mxu0 0.0
        %317 = vmatprep.subr.mxu0 0.0
        %318 = vmatpush2.msra.mxu0 0.0
        %319 = vmatprep.subr.mxu0 0.0
        %320 = vmatpush2.msra.mxu0 0.0
        %321 = vmatprep.subr.mxu0 0.0
        %322 = vmatpush2.msra.mxu0 0.0
        %323 = vmatprep.mubr.f32.mxu0 0.0
        %324 = vmatmul.mubr.f32.gmra.mxu0 %v179
        %v325 = vpop.f32.mrf.mxu0
        %v326 = vadd.f32 0.0, %v325
        %v327 = vpop.f32.mrf.mxu0
        %328 = vmatprep.mubr.f32.mxu0 0.0
        %329 = vmatmul.mubr.f32.gmra.mxu0 %v180
        %v330 = vpop.f32.mrf.mxu0
        %v331 = vadd.f32 0.0, %v330
        %v332 = vpop.f32.mrf.mxu0
        %333 = vmatprep.mubr.f32.mxu0 0.0
        %334 = vmatmul.mubr.f32.gmra.mxu0 %v181
        %v335 = vpop.f32.mrf.mxu0
        %v336 = vadd.f32 0.0, %v335
        %v337 = vpop.f32.mrf.mxu0
        %338 = vmatprep.mubr.f32.mxu0 0.0
        %339 = vmatmul.mubr.f32.gmra.mxu0 %v182
        %v340 = vpop.f32.mrf.mxu0
        %v341 = vadd.f32 0.0, %v340
        %v342 = vpop.f32.mrf.mxu0
        %343 = vmatprep.mubr.f32.mxu0 0.0
        %344 = vmatmul.mubr.f32.gmra.mxu0 %v183
        %v345 = vpop.f32.mrf.mxu0
        %v346 = vadd.f32 0.0, %v345
        %v347 = vpop.f32.mrf.mxu0
        %348 = vmatprep.mubr.f32.mxu0 0.0
        %349 = vmatmul.mubr.f32.gmra.mxu0 %v184
        %v350 = vpop.f32.mrf.mxu0
        %v351 = vadd.f32 0.0, %v350
        %v352 = vpop.f32.mrf.mxu0
        %353 = vmatprep.mubr.f32.mxu0 0.0
        %354 = vmatmul.mubr.f32.gmra.mxu0 %v185
        %v355 = vpop.f32.mrf.mxu0
        %v356 = vadd.f32 0.0, %v355
        %v357 = vpop.f32.mrf.mxu0
        %358 = vmatprep.mubr.f32.mxu0 0.0
        %359 = vmatmul.mubr.f32.gmra.mxu0 %v186
        %v360 = vpop.f32.mrf.mxu0
        %v361 = vadd.f32 0.0, %v360
        %v362 = vpop.f32.mrf.mxu0
        %363 = vmatprep.mubr.f32.mxu0 0.0
        %364 = vmatmul.mubr.f32.gmra.mxu0 %v187
        %v365 = vpop.f32.mrf.mxu0
        %v366 = vadd.f32 0.0, %v365
        %v367 = vpop.f32.mrf.mxu0
        %368 = vmatprep.mubr.f32.mxu0 0.0
        %369 = vmatmul.mubr.f32.gmra.mxu0 %v188
        %v370 = vpop.f32.mrf.mxu0
        %v371 = vadd.f32 0.0, %v370
        %v372 = vpop.f32.mrf.mxu0
        %373 = vmatprep.mubr.f32.mxu0 0.0
        %374 = vmatmul.mubr.f32.gmra.mxu0 %v189
        %v375 = vpop.f32.mrf.mxu0
        %v376 = vadd.f32 0.0, %v375
        %v377 = vpop.f32.mrf.mxu0
        %378 = vmatprep.mubr.f32.mxu0 0.0
        %379 = vmatmul.mubr.f32.gmra.mxu0 %v190
        %v380 = vpop.f32.mrf.mxu0
        %v381 = vadd.f32 0.0, %v380
        %v382 = vpop.f32.mrf.mxu0
        %383 = vmatprep.mubr.f32.mxu0 0.0
        %384 = vmatmul.mubr.f32.gmra.mxu0 %v191
        %v385 = vpop.f32.mrf.mxu0
        %v386 = vadd.f32 0.0, %v385
        %v387 = vpop.f32.mrf.mxu0
        %388 = vmatprep.mubr.f32.mxu0 0.0
        %389 = vmatmul.mubr.f32.gmra.mxu0 %v192
        %v390 = vpop.f32.mrf.mxu0
        %v391 = vadd.f32 0.0, %v390
        %v392 = vpop.f32.mrf.mxu0
        %393 = vmatprep.mubr.f32.mxu0 0.0
        %394 = vmatmul.mubr.f32.gmra.mxu0 %v193
        %v395 = vpop.f32.mrf.mxu0
        %v396 = vadd.f32 0.0, %v395
        %v397 = vpop.f32.mrf.mxu0
        %398 = vmatprep.mubr.f32.mxu0 0.0
        %399 = vmatmul.mubr.f32.gmra.mxu0 %v194
        %v400 = vpop.f32.mrf.mxu0
        %v401 = vadd.f32 0.0, %v400
        %v402 = vpop.f32.mrf.mxu0
        %403 = vmatprep.mubr.f32.mxu0 0.0
        %404 = vmatmul.mubr.f32.gmra.mxu0 %v195
        %v405 = vpop.f32.mrf.mxu0
        %v406 = vadd.f32 0.0, %v405
        %v407 = vpop.f32.mrf.mxu0
        %408 = vmatprep.mubr.f32.mxu0 0.0
        %409 = vmatmul.mubr.f32.gmra.mxu0 %v196
        %v410 = vpop.f32.mrf.mxu0
        %v411 = vadd.f32 0.0, %v410
        %v412 = vpop.f32.mrf.mxu0
        %413 = vmatprep.mubr.f32.mxu0 0.0
        %414 = vmatmul.mubr.f32.gmra.mxu0 %v197
        %v415 = vpop.f32.mrf.mxu0
        %v416 = vadd.f32 0.0, %v415
        %v417 = vpop.f32.mrf.mxu0
        %418 = vmatprep.mubr.f32.mxu0 0.0
        %419 = vmatmul.mubr.f32.gmra.mxu0 %v198
        %v420 = vpop.f32.mrf.mxu0
        %v421 = vadd.f32 0.0, %v420
        %v422 = vpop.f32.mrf.mxu0
        %423 = vmatprep.mubr.f32.mxu0 0.0
        %424 = vmatmul.mubr.f32.gmra.mxu0 %v199
        %v425 = vpop.f32.mrf.mxu0
        %v426 = vadd.f32 0.0, %v425
        %v427 = vpop.f32.mrf.mxu0
        %428 = vmatprep.mubr.f32.mxu0 0.0
        %429 = vmatmul.mubr.f32.gmra.mxu0 %v200
        %v430 = vpop.f32.mrf.mxu0
        %v431 = vadd.f32 0.0, %v430
        %v432 = vpop.f32.mrf.mxu0
        %433 = vmatprep.mubr.f32.mxu0 0.0
        %434 = vmatmul.mubr.f32.gmra.mxu0 %v201
        %v435 = vpop.f32.mrf.mxu0
        %v436 = vadd.f32 0.0, %v435
        %v437 = vpop.f32.mrf.mxu0
        %438 = vmatprep.mubr.f32.mxu0 0.0
        %439 = vmatmul.mubr.f32.gmra.mxu0 %v202
        %v440 = vpop.f32.mrf.mxu0
        %v441 = vadd.f32 0.0, %v440
        %v442 = vpop.f32.mrf.mxu0
        %443 = vmatprep.mubr.f32.mxu0 0.0
        %444 = vmatmul.mubr.f32.gmra.mxu0 %v203
        %v445 = vpop.f32.mrf.mxu0
        %v446 = vadd.f32 0.0, %v445
        %v447 = vpop.f32.mrf.mxu0
        %448 = vmatprep.mubr.f32.mxu0 0.0
        %449 = vmatmul.mubr.f32.gmra.mxu0 %v204
        %v450 = vpop.f32.mrf.mxu0
        %v451 = vadd.f32 0.0, %v450
        %v452 = vpop.f32.mrf.mxu0
        %453 = vmatprep.mubr.f32.mxu0 0.0
        %454 = vmatmul.mubr.f32.gmra.mxu0 %v205
        %v455 = vpop.f32.mrf.mxu0
        %v456 = vadd.f32 0.0, %v455
        %v457 = vpop.f32.mrf.mxu0
        %458 = vmatprep.mubr.f32.mxu0 0.0
        %459 = vmatmul.mubr.f32.gmra.mxu0 %v206
        %v460 = vpop.f32.mrf.mxu0
        %v461 = vadd.f32 0.0, %v460
        %v462 = vpop.f32.mrf.mxu0
        %463 = vmatprep.mubr.f32.mxu0 0.0
        %464 = vmatmul.mubr.f32.gmra.mxu0 %v207
        %v465 = vpop.f32.mrf.mxu0
        %v466 = vadd.f32 0.0, %v465
        %v467 = vpop.f32.mrf.mxu0
        %468 = vmatprep.mubr.f32.mxu0 0.0
        %469 = vmatmul.mubr.f32.gmra.mxu0 %v208
        %v470 = vpop.f32.mrf.mxu0
        %v471 = vadd.f32 0.0, %v470
        %v472 = vpop.f32.mrf.mxu0
        %473 = vmatprep.mubr.f32.mxu0 0.0
        %474 = vmatmul.mubr.f32.gmra.mxu0 %v209
        %v475 = vpop.f32.mrf.mxu0
        %v476 = vadd.f32 0.0, %v475
        %v477 = vpop.f32.mrf.mxu0
        %478 = vmatprep.mubr.f32.mxu0 0.0
        %479 = vmatmul.mubr.f32.gmra.mxu0 %v210
        %v480 = vpop.f32.mrf.mxu0
        %v481 = vadd.f32 0.0, %v480
        %v482 = vpop.f32.mrf.mxu0
        %483 = vmatprep.mubr.f32.mxu0 0.0
        %484 = vmatmul.mubr.f32.gmra.mxu0 %v211
        %v485 = vpop.f32.mrf.mxu0
        %v486 = vadd.f32 0.0, %v485
        %v487 = vpop.f32.mrf.mxu0
        %488 = vmatprep.mubr.f32.mxu0 0.0
        %489 = vmatmul.mubr.f32.gmra.mxu0 %v212
        %v490 = vpop.f32.mrf.mxu0
        %v491 = vadd.f32 0.0, %v490
        %v492 = vpop.f32.mrf.mxu0
        %493 = vmatprep.mubr.f32.mxu0 0.0
        %494 = vmatmul.mubr.f32.gmra.mxu0 %v213
        %v495 = vpop.f32.mrf.mxu0
        %v496 = vadd.f32 0.0, %v495
        %v497 = vpop.f32.mrf.mxu0
        %498 = vmatprep.mubr.f32.mxu0 0.0
        %499 = vmatmul.mubr.f32.gmra.mxu0 %v214
        %v500 = vpop.f32.mrf.mxu0
        %v501 = vadd.f32 0.0, %v500
        %v502 = vpop.f32.mrf.mxu0
        %503 = vmatprep.mubr.f32.mxu0 0.0
        %504 = vmatmul.mubr.f32.gmra.mxu0 %v215
        %v505 = vpop.f32.mrf.mxu0
        %v506 = vadd.f32 0.0, %v505
        %v507 = vpop.f32.mrf.mxu0
        %508 = vmatprep.mubr.f32.mxu0 0.0
        %509 = vmatmul.mubr.f32.gmra.mxu0 %v216
        %v510 = vpop.f32.mrf.mxu0
        %v511 = vadd.f32 0.0, %v510
        %v512 = vpop.f32.mrf.mxu0
        %513 = vmatprep.mubr.f32.mxu0 0.0
        %514 = vmatmul.mubr.f32.gmra.mxu0 %v217
        %v515 = vpop.f32.mrf.mxu0
        %v516 = vadd.f32 0.0, %v515
        %v517 = vpop.f32.mrf.mxu0
        %518 = vmatprep.mubr.f32.mxu0 0.0
        %519 = vmatmul.mubr.f32.gmra.mxu0 %v218
        %v520 = vpop.f32.mrf.mxu0
        %v521 = vadd.f32 0.0, %v520
        %v522 = vpop.f32.mrf.mxu0
        %523 = vmatprep.mubr.f32.mxu0 0.0
        %524 = vmatmul.mubr.f32.gmra.mxu0 %v219
        %v525 = vpop.f32.mrf.mxu0
        %v526 = vadd.f32 0.0, %v525
        %v527 = vpop.f32.mrf.mxu0
        %528 = vmatprep.mubr.f32.mxu0 0.0
        %529 = vmatmul.mubr.f32.gmra.mxu0 %v220
        %v530 = vpop.f32.mrf.mxu0
        %v531 = vadd.f32 0.0, %v530
        %v532 = vpop.f32.mrf.mxu0
        %533 = vmatprep.mubr.f32.mxu0 0.0
        %534 = vmatmul.mubr.f32.gmra.mxu0 %v221
        %v535 = vpop.f32.mrf.mxu0
        %v536 = vadd.f32 0.0, %v535
        %v537 = vpop.f32.mrf.mxu0
        %538 = vmatprep.mubr.f32.mxu0 0.0
        %539 = vmatmul.mubr.f32.gmra.mxu0 %v222
        %v540 = vpop.f32.mrf.mxu0
        %v541 = vadd.f32 0.0, %v540
        %v542 = vpop.f32.mrf.mxu0
        %543 = vmatprep.mubr.f32.mxu0 0.0
        %544 = vmatmul.mubr.f32.gmra.mxu0 %v223
        %v545 = vpop.f32.mrf.mxu0
        %v546 = vadd.f32 0.0, %v545
        %v547 = vpop.f32.mrf.mxu0
        %548 = vmatprep.mubr.f32.mxu0 0.0
        %549 = vmatmul.mubr.f32.gmra.mxu0 %v224
        %v550 = vpop.f32.mrf.mxu0
        %v551 = vadd.f32 0.0, %v550
        %v552 = vpop.f32.mrf.mxu0
        %553 = vmatprep.mubr.f32.mxu0 0.0
        %554 = vmatmul.mubr.f32.gmra.mxu0 %v225
        %v555 = vpop.f32.mrf.mxu0
        %v556 = vadd.f32 0.0, %v555
        %v557 = vpop.f32.mrf.mxu0
        %558 = vmatprep.mubr.f32.mxu0 0.0
        %559 = vmatmul.mubr.f32.gmra.mxu0 %v226
        %v560 = vpop.f32.mrf.mxu0
        %v561 = vadd.f32 0.0, %v560
        %v562 = vpop.f32.mrf.mxu0
        %563 = vmatprep.mubr.f32.mxu0 0.0
        %564 = vmatmul.mubr.f32.gmra.mxu0 %v227
        %v565 = vpop.f32.mrf.mxu0
        %v566 = vadd.f32 0.0, %v565
        %v567 = vpop.f32.mrf.mxu0
        %568 = vmatprep.mubr.f32.mxu0 0.0
        %569 = vmatmul.mubr.f32.gmra.mxu0 %v228
        %v570 = vpop.f32.mrf.mxu0
        %v571 = vadd.f32 0.0, %v570
        %v572 = vpop.f32.mrf.mxu0
        %573 = vmatprep.mubr.f32.mxu0 0.0
        %574 = vmatmul.mubr.f32.gmra.mxu0 %v229
        %v575 = vpop.f32.mrf.mxu0
        %v576 = vadd.f32 0.0, %v575
        %v577 = vpop.f32.mrf.mxu0
        %578 = vmatprep.mubr.f32.mxu0 0.0
        %579 = vmatmul.mubr.f32.gmra.mxu0 %v230
        %v580 = vpop.f32.mrf.mxu0
        %v581 = vadd.f32 0.0, %v580
        %v582 = vpop.f32.mrf.mxu0
        %583 = vmatprep.mubr.f32.mxu0 0.0
        %584 = vmatmul.mubr.f32.gmra.mxu0 %v231
        %v585 = vpop.f32.mrf.mxu0
        %v586 = vadd.f32 0.0, %v585
        %v587 = vpop.f32.mrf.mxu0
        %588 = vmatprep.mubr.f32.mxu0 0.0
        %589 = vmatmul.mubr.f32.gmra.mxu0 %v232
        %v590 = vpop.f32.mrf.mxu0
        %v591 = vadd.f32 0.0, %v590
        %v592 = vpop.f32.mrf.mxu0
        %593 = vmatprep.mubr.f32.mxu0 0.0
        %594 = vmatmul.mubr.f32.gmra.mxu0 %v233
        %v595 = vpop.f32.mrf.mxu0
        %v596 = vadd.f32 0.0, %v595
        %v597 = vpop.f32.mrf.mxu0
        %598 = vmatprep.mubr.f32.mxu0 0.0
        %599 = vmatmul.mubr.f32.gmra.mxu0 %v234
        %v600 = vpop.f32.mrf.mxu0
        %v601 = vadd.f32 0.0, %v600
        %v602 = vpop.f32.mrf.mxu0
        %603 = vmatprep.mubr.f32.mxu0 0.0
        %604 = vmatmul.mubr.f32.gmra.mxu0 %v235
        %v605 = vpop.f32.mrf.mxu0
        %v606 = vadd.f32 0.0, %v605
        %v607 = vpop.f32.mrf.mxu0
        %608 = vmatprep.mubr.f32.mxu0 0.0
        %609 = vmatmul.mubr.f32.gmra.mxu0 %v236
        %v610 = vpop.f32.mrf.mxu0
        %v611 = vadd.f32 0.0, %v610
        %v612 = vpop.f32.mrf.mxu0
        %613 = vmatprep.mubr.f32.mxu0 0.0
        %614 = vmatmul.mubr.f32.gmra.mxu0 %v237
        %v615 = vpop.f32.mrf.mxu0
        %v616 = vadd.f32 0.0, %v615
        %v617 = vpop.f32.mrf.mxu0
        %618 = vmatprep.mubr.f32.mxu0 0.0
        %619 = vmatmul.mubr.f32.gmra.mxu0 %v238
        %v620 = vpop.f32.mrf.mxu0
        %v621 = vadd.f32 0.0, %v620
        %v622 = vpop.f32.mrf.mxu0
        %623 = vmatprep.mubr.f32.mxu0 0.0
        %624 = vmatmul.mubr.f32.gmra.mxu0 %v239
        %v625 = vpop.f32.mrf.mxu0
        %v626 = vadd.f32 0.0, %v625
        %v627 = vpop.f32.mrf.mxu0
        %628 = vmatprep.mubr.f32.mxu0 0.0
        %629 = vmatmul.mubr.f32.gmra.mxu0 %v240
        %v630 = vpop.f32.mrf.mxu0
        %v631 = vadd.f32 0.0, %v630
        %v632 = vpop.f32.mrf.mxu0
        %633 = vmatprep.mubr.f32.mxu0 0.0
        %634 = vmatmul.mubr.f32.gmra.mxu0 %v241
        %v635 = vpop.f32.mrf.mxu0
        %v636 = vadd.f32 0.0, %v635
        %v637 = vpop.f32.mrf.mxu0
        %638 = vmatprep.mubr.f32.mxu0 0.0
        %639 = vmatmul.mubr.f32.gmra.mxu0 %v242
        %v640 = vpop.f32.mrf.mxu0
        %v641 = vadd.f32 0.0, %v640
        %v642 = vpop.f32.mrf.mxu0
        %643 = vdwg.mxu0
        %644 = vst [vmem:[%s176] sm:$0xff] %v326
        %645 = vst [vmem:[%s176 + $0x8] sm:$0xff] %v331
        %646 = vst [vmem:[%s176 + $0x10] sm:$0xff] %v336
        %647 = vst [vmem:[%s176 + $0x18] sm:$0xff] %v341
        %648 = vst [vmem:[%s176 + $0x20] sm:$0xff] %v346
        %649 = vst [vmem:[%s176 + $0x28] sm:$0xff] %v351
        %650 = vst [vmem:[%s176 + $0x30] sm:$0xff] %v356
        %651 = vst [vmem:[%s176 + $0x38] sm:$0xff] %v361
        %652 = vst [vmem:[%s176 + $0x40] sm:$0xff] %v366
        %653 = vst [vmem:[%s176 + $0x48] sm:$0xff] %v371
        %654 = vst [vmem:[%s176 + $0x50] sm:$0xff] %v376
        %655 = vst [vmem:[%s176 + $0x58] sm:$0xff] %v381
        %656 = vst [vmem:[%s176 + $0x60] sm:$0xff] %v386
        %657 = vst [vmem:[%s176 + $0x68] sm:$0xff] %v391
        %658 = vst [vmem:[%s176 + $0x70] sm:$0xff] %v396
        %659 = vst [vmem:[%s176 + $0x78] sm:$0xff] %v401
        %660 = vst [vmem:[%s176 + $0x80] sm:$0xff] %v406
        %661 = vst [vmem:[%s176 + $0x88] sm:$0xff] %v411
        %662 = vst [vmem:[%s176 + $0x90] sm:$0xff] %v416
        %663 = vst [vmem:[%s176 + $0x98] sm:$0xff] %v421
        %664 = vst [vmem:[%s176 + $0xa0] sm:$0xff] %v426
        %665 = vst [vmem:[%s176 + $0xa8] sm:$0xff] %v431
        %666 = vst [vmem:[%s176 + $0xb0] sm:$0xff] %v436
        %667 = vst [vmem:[%s176 + $0xb8] sm:$0xff] %v441
        %668 = vst [vmem:[%s176 + $0xc0] sm:$0xff] %v446
        %669 = vst [vmem:[%s176 + $0xc8] sm:$0xff] %v451
        %670 = vst [vmem:[%s176 + $0xd0] sm:$0xff] %v456
        %671 = vst [vmem:[%s176 + $0xd8] sm:$0xff] %v461
        %672 = vst [vmem:[%s176 + $0xe0] sm:$0xff] %v466
        %673 = vst [vmem:[%s176 + $0xe8] sm:$0xff] %v471
        %674 = vst [vmem:[%s176 + $0xf0] sm:$0xff] %v476
        %675 = vst [vmem:[%s176 + $0xf8] sm:$0xff] %v481
        %676 = vst [vmem:[%s176 + $0x100] sm:$0xff] %v486
        %677 = vst [vmem:[%s176 + $0x108] sm:$0xff] %v491
        %678 = vst [vmem:[%s176 + $0x110] sm:$0xff] %v496
        %679 = vst [vmem:[%s176 + $0x118] sm:$0xff] %v501
        %680 = vst [vmem:[%s176 + $0x120] sm:$0xff] %v506
        %681 = vst [vmem:[%s176 + $0x128] sm:$0xff] %v511
        %682 = vst [vmem:[%s176 + $0x130] sm:$0xff] %v516
        %683 = vst [vmem:[%s176 + $0x138] sm:$0xff] %v521
        %684 = vst [vmem:[%s176 + $0x140] sm:$0xff] %v526
        %685 = vst [vmem:[%s176 + $0x148] sm:$0xff] %v531
        %686 = vst [vmem:[%s176 + $0x150] sm:$0xff] %v536
        %687 = vst [vmem:[%s176 + $0x158] sm:$0xff] %v541
        %688 = vst [vmem:[%s176 + $0x160] sm:$0xff] %v546
        %689 = vst [vmem:[%s176 + $0x168] sm:$0xff] %v551
        %690 = vst [vmem:[%s176 + $0x170] sm:$0xff] %v556
        %691 = vst [vmem:[%s176 + $0x178] sm:$0xff] %v561
        %692 = vst [vmem:[%s176 + $0x180] sm:$0xff] %v566
        %693 = vst [vmem:[%s176 + $0x188] sm:$0xff] %v571
        %694 = vst [vmem:[%s176 + $0x190] sm:$0xff] %v576
        %695 = vst [vmem:[%s176 + $0x198] sm:$0xff] %v581
        %696 = vst [vmem:[%s176 + $0x1a0] sm:$0xff] %v586
        %697 = vst [vmem:[%s176 + $0x1a8] sm:$0xff] %v591
        %698 = vst [vmem:[%s176 + $0x1b0] sm:$0xff] %v596
        %699 = vst [vmem:[%s176 + $0x1b8] sm:$0xff] %v601
        %700 = vst [vmem:[%s176 + $0x1c0] sm:$0xff] %v606
        %701 = vst [vmem:[%s176 + $0x1c8] sm:$0xff] %v611
        %702 = vst [vmem:[%s176 + $0x1d0] sm:$0xff] %v616
        %703 = vst [vmem:[%s176 + $0x1d8] sm:$0xff] %v621
        %704 = vst [vmem:[%s176 + $0x1e0] sm:$0xff] %v626
        %705 = vst [vmem:[%s176 + $0x1e8] sm:$0xff] %v631
        %706 = vst [vmem:[%s176 + $0x1f0] sm:$0xff] %v636
        %707 = vst [vmem:[%s176 + $0x1f8] sm:$0xff] %v641
        %s708 = sand.u32 %s75, 1
        %s709 = scalar_lea.sflag [#allocation4], %s708
        %s710 = sand.u32 %s75, 1
        %s711 = smul.addr %s710, 512
        %s712 = scalar_lea.vmem [#allocation7], %s711
        // Predicated region
        $region37: #{tpu_custom_call.1} parent=27 // pred_check
          %p713 = pneg %p85
        $region38: #{tpu_custom_call.1} parent=27 // pred_check_branch
          %715 = sbr.rel (%p713) target = $region40
        $region39: #{tpu_custom_call.1} parent=27 // pred_region
          %s716 = smul.u32 64, %s20
          %s718 = ssub.s32 8192, 8192
          %719 = vsyncadd %s709, %s718
          %s720 = smul.addr %s716, 128
          %s721 = scalar_lea.hbm %s2, %s720
          %s722 = sshll.u32 %s712, 4
          %s723 = int_to_ptr.vmem [resolvable:$true] %s722
          %728 = dma.vmem_to_hbm [thread:$0]  %s723, 8192, %s721, %s709, 128, 128, 8
        $region40: #{tpu_custom_call.1} parent=27 // pred_fallthru
          _
      $region28: #{tpu_custom_call.1} parent=5 // pred_fallthru
        _
      %p729 = scmp.le.s32.totalorder 2, %s15
      // Predicated region
      $region41: #{tpu_custom_call.1} parent=5 // pred_check
        %p730 = pneg %p729
      $region42: #{tpu_custom_call.1} parent=5 // pred_check_branch
        %732 = sbr.rel (%p730) target = $region44
      $region43: #{tpu_custom_call.1} parent=5 // pred_region
        %s733 = ssub.s32 %s15, 2
        // Predicated region
        $region45: #{tpu_custom_call.1} parent=43 // pred_check
          %p734 = pneg %p91
        $region46: #{tpu_custom_call.1} parent=43 // pred_check_branch
          %736 = sbr.rel (%p734) target = $region48
        $region47: #{tpu_custom_call.1} parent=43 // pred_region
          %s737 = sand.u32 %s76, 1
          %s738 = scalar_lea.sflag [#allocation4], %s737
          %s739 = sand.u32 %s76, 1
          %s740 = smul.addr %s739, 512
          %s741 = scalar_lea.vmem [#allocation7], %s740
          %742 = dma.done %s738, 8192
        $region48: #{tpu_custom_call.1} parent=43 // pred_fallthru
          _
      $region44: #{tpu_custom_call.1} parent=5 // pred_fallthru
        _
    $region6: #{tpu_custom_call.1} parent=1 // loop_footer
      %s19 = sadd.s32 1, %s15
    $region7: #{tpu_custom_call.1} parent=1 // loop_footer_branch
      %14 = sbr.rel target = $region3
    $region8: #{tpu_custom_call.1} parent=1 // loop_exit
      _
    %743 = vsyncpa [#allocation3], 1
    %s744 = scalar_lea.sflag [#allocation3], 1
    %745 = vsyncpa %s744, 1
    %746 = vsyncpa [#allocation6], 1
    %747 = vsyncpa [#allocation4], 1
    %s748 = scalar_lea.sflag [#allocation4], 1
    %749 = vsyncpa %s748, 1

</llo_original>
